<compile_context>
chip_gen: v7x
topology: tpu7x:2x2x1
jax: 0.10.0
libtpu: 0.0.40
codegen_flags: <defaults>
</compile_context>

<pallas_src>
import functools

import jax
import jax.numpy as jnp
from jax.experimental import pallas as pl
from jax.experimental.pallas import tpu as pltpu


# ----------------------------------------------------------------------------
# Tiling heuristics
# ----------------------------------------------------------------------------
_TARGET_STEP_BYTES = 1 << 20    # ~1 MiB of activation traffic per grid step
_VMEM_BUDGET_BYTES = 24 << 20   # buffer budget safe on v5e/v6e/v7x
_MAX_TK = 512                   # contraction (C_in) block cap
_MAX_B_TILE = 8                 # images fused per grid step (unrolled dots)


def _largest_divisor_leq(n, cap):
    cap = max(1, min(n, cap))
    for d in range(cap, 0, -1):
        if n % d == 0:
            return d
    return 1


def _choose_tiling(n, c_in, c_out, hw, dtype_bytes):
    hw_pad = pl.cdiv(hw, 128) * 128

    # K tiling only when C_in is large and cleanly 128-blockable, so tk always
    # divides C_in exactly (no padded tail ever enters the accumulation).
    tk, n_k = c_in, 1
    if c_in > _MAX_TK and c_in % 128 == 0:
        tk = 128 * _largest_divisor_leq(c_in // 128, _MAX_TK // 128)
        n_k = c_in // tk

    # Spatial tile: aim for ~_TARGET_STEP_BYTES of x traffic per step.
    want_lanes = _TARGET_STEP_BYTES // max(dtype_bytes * tk, 1)
    tile = min(hw_pad, max(128, (want_lanes // 128) * 128))

    # Batch blocking: whole image fits one spatial tile and step is still small
    # -> fuse several images per grid step (amortize ~0.35 us/step overhead).
    b_tile = 1
    if tile >= hw_pad and n_k == 1:
        step_bytes = dtype_bytes * hw_pad * (c_in + c_out)
        want_b = max(1, _TARGET_STEP_BYTES // max(step_bytes, 1))
        b_tile = _largest_divisor_leq(n, min(want_b, _MAX_B_TILE))

    # VMEM budget: shrink until the (double-buffered) blocks fit on every gen.
    def buffers_bytes(b_t, t):
        return (2 * b_t * tk * t * dtype_bytes                        # x
                + 2 * b_t * c_out * t * dtype_bytes                   # out
                + (2 if n_k > 1 else 1) * c_out * tk * dtype_bytes    # weight
                + (b_t * c_out * t * 4 if n_k > 1 else 0)             # f32 acc
                + c_out * dtype_bytes)                                 # bias

    while buffers_bytes(b_tile, tile) > _VMEM_BUDGET_BYTES:
        if b_tile > 1:
            b_tile = _largest_divisor_leq(n, b_tile - 1)
        elif tile > 128:
            tile = max(128, (tile // 2) // 128 * 128)
        else:
            break

    # Megacore (v7x): if everything collapsed into one parallel grid step but
    # the step is big enough to matter, split it so both TensorCores get work.
    if (n // b_tile) * pl.cdiv(hw, tile) == 1:
        step_bytes = dtype_bytes * b_tile * tile * (tk + c_out)
        if step_bytes >= 2 * (256 << 10):
            if b_tile % 2 == 0:
                b_tile //= 2
            elif tile > 128:
                tile = max(128, (tile // 2) // 128 * 128)

    return b_tile, tile, tk, n_k


# ----------------------------------------------------------------------------
# Pallas kernels
# ----------------------------------------------------------------------------
def _pw_conv_kernel(x_ref, w_ref, b_ref, o_ref):
    # x_ref: (b_tile, C_in, T)  w_ref: (C_out, C_in)  b_ref: (C_out, 1)
    # o_ref: (b_tile, C_out, T)
    w = w_ref[...]
    b = b_ref[...]
    for bi in range(x_ref.shape[0]):          # short static unroll (<= 8)
        acc = jnp.dot(w, x_ref[bi], preferred_element_type=jnp.float32)
        o_ref[bi] = (acc + b).astype(o_ref.dtype)


def _pw_conv_kernel_ktiled(x_ref, w_ref, b_ref, o_ref, acc_ref):
    # Third grid axis tiles the contraction (C_in); acc_ref is an f32 scratch
    # accumulator that lives across the "arbitrary" K axis.
    k = pl.program_id(2)

    @pl.when(k == 0)
    def _():
        acc_ref[...] = jnp.zeros_like(acc_ref)

    w = w_ref[...]
    for bi in range(x_ref.shape[0]):
        acc_ref[bi] += jnp.dot(w, x_ref[bi], preferred_element_type=jnp.float32)

    @pl.when(k == pl.num_programs(2) - 1)
    def _():
        o_ref[...] = (acc_ref[...] + b_ref[...][None]).astype(o_ref.dtype)


# ----------------------------------------------------------------------------
# Wrapper: 1x1 Conv2d, NCHW in / NCHW out, no layout plumbing
# ----------------------------------------------------------------------------
def pointwise_conv_pallas(x_nchw, weight, bias):
    """1x1 Conv2d (NCHW) via a Pallas kernel.

    x_nchw : (N, C_in, H, W)
    weight : (C_out, C_in) or (C_out, C_in, 1, 1)
    bias   : (C_out,)
    """
    n, c_in, h, w_sp = x_nchw.shape
    if weight.ndim == 4:  # torch Conv2d weight layout
        weight = weight.reshape(weight.shape[0], weight.shape[1])
    c_out = weight.shape[0]
    hw = h * w_sp
    dtype_bytes = x_nchw.dtype.itemsize

    # Free reshapes (contiguous trailing dims): no HBM transpose passes.
    x3 = x_nchw.reshape(n, c_in, hw)
    b_col = bias.reshape(c_out, 1)

    b_tile, tile, tk, n_k = _choose_tiling(n, c_in, c_out, hw, dtype_bytes)
    grid = (n // b_tile, pl.cdiv(hw, tile), n_k)

    x_spec = pl.BlockSpec((b_tile, tk, tile), lambda b, j, k: (b, k, j))
    o_spec = pl.BlockSpec((b_tile, c_out, tile), lambda b, j, k: (b, 0, j))
    # Grid-invariant bias: single-buffered (no pointless double-buffer VMEM).
    bias_spec = pl.BlockSpec((c_out, 1), lambda b, j, k: (0, 0),
                             pipeline_mode=pl.Buffered(1))

    if n_k == 1:
        kernel = _pw_conv_kernel
        # Grid-invariant weight: single-buffered.
        w_spec = pl.BlockSpec((c_out, tk), lambda b, j, k: (0, 0),
                              pipeline_mode=pl.Buffered(1))
        scratch = ()
    else:
        kernel = _pw_conv_kernel_ktiled
        # Weight varies with k: keep default double-buffering for overlap.
        w_spec = pl.BlockSpec((c_out, tk), lambda b, j, k: (0, k))
        scratch = (pltpu.VMEM((b_tile, c_out, tile), jnp.float32),)

    # Explicit scoped-VMEM limit: actual need (+50% headroom), floored at the
    # 32 MiB default and capped below v7x's 64 MiB physical VMEM.
    needed = (2 * b_tile * tk * tile * dtype_bytes
              + 2 * b_tile * c_out * tile * dtype_bytes
              + (2 if n_k > 1 else 1) * c_out * tk * dtype_bytes
              + (b_tile * c_out * tile * 4 if n_k > 1 else 0)
              + c_out * dtype_bytes)
    vmem_limit = int(min(48 << 20, max(32 << 20, needed * 3 // 2)))

    cost = pl.CostEstimate(
        flops=2 * n * c_out * c_in * hw,
        transcendentals=0,
        bytes_accessed=dtype_bytes * (n * c_in * hw + n * c_out * hw
                                      + c_out * c_in + c_out),
    )

    out3 = pl.pallas_call(
        kernel,
        out_shape=jax.ShapeDtypeStruct((n, c_out, hw), x_nchw.dtype),
        grid_spec=pltpu.PrefetchScalarGridSpec(
            num_scalar_prefetch=0,
            grid=grid,
            in_specs=[x_spec, w_spec, bias_spec],
            out_specs=o_spec,
            scratch_shapes=scratch,
        ),
        compiler_params=pltpu.CompilerParams(
            dimension_semantics=("parallel", "parallel", "arbitrary"),
            vmem_limit_bytes=vmem_limit,
        ),
        cost_estimate=cost,
    )(x3, weight, b_col)

    # Free reshape back to NCHW.
    return out3.reshape(n, c_out, h, w_sp)


# ----------------------------------------------------------------------------
# NamedOperation: transparent named wrapper (forward(x) == module(x))
# ----------------------------------------------------------------------------
class NamedOperation:
    """Includes the operation name into the representation string for
    debugging.  Forward pass is an exact pass-through to the wrapped module.
    """

    def __init__(self, name, module):
        self.name = name
        self.module = module

    def __repr__(self):
        return f"{self.__class__.__name__}[{self.name}]"

    def __call__(self, x):
        return self.module(x)


if __name__ == "__main__":
    key = jax.random.PRNGKey(0)
    k_x, k_w, k_b = jax.random.split(key, 3)

    # Small shapes consistent with a vision-model op: NCHW
    N, C_IN, H, W = 2, 4, 16, 16
    C_OUT = 8

    x = jax.random.normal(k_x, (N, C_IN, H, W), dtype=jnp.float32)
    # Deterministic synthetic parameters (Conv2d(C_IN, C_OUT, kernel_size=1))
    weight = jax.random.normal(k_w, (C_OUT, C_IN), dtype=jnp.float32) * 0.1
    bias = jax.random.normal(k_b, (C_OUT,), dtype=jnp.float32) * 0.01

    wrapped = functools.partial(pointwise_conv_pallas, weight=weight, bias=bias)
    op = NamedOperation("conv_1x1", wrapped)

    out = op(x)
    out = jax.block_until_ready(out)

    # Cross-check the pass-through semantics against a plain JAX reference.
    ref = jnp.einsum("nchw,oc->nohw", x, weight) + bias[None, :, None, None]
    assert out.shape == (N, C_OUT, H, W)
    assert jnp.allclose(out, ref, atol=1e-4, rtol=1e-4)

    print("KERNEL_OK")
</pallas_src>

<mosaic_0001>
module attributes {stable_mosaic.version = 11 : i64} {
  func.func @_pw_conv_kernel(%arg0: i32, %arg1: i32, %arg2: i32, %arg3: memref<2x4x256xf32, #tpu.memory_space<vmem>>, %arg4: memref<8x4xf32, #tpu.memory_space<vmem>>, %arg5: memref<8x1xf32, #tpu.memory_space<vmem>>, %arg6: memref<2x8x256xf32, #tpu.memory_space<vmem>>) attributes {dimension_semantics = [#tpu.dimension_semantics<parallel>, #tpu.dimension_semantics<parallel>, #tpu.dimension_semantics<arbitrary>], iteration_bounds = array<i64: 1, 1, 1>, scalar_prefetch = 0 : i64, scratch_operands = 0 : i64, tpu.core_type = #tpu.core_type<tc>, window_params = [{transform_indices = @transform_0, window_bounds = array<i64: 2, 4, 256>}, {pipeline_mode = #tpu.pipeline_mode<synchronous>, transform_indices = @transform_1, window_bounds = array<i64: 8, 4>}, {pipeline_mode = #tpu.pipeline_mode<synchronous>, transform_indices = @transform_2, window_bounds = array<i64: 8, 1>}, {transform_indices = @transform_3, window_bounds = array<i64: 2, 8, 256>}]} {
    %c0 = arith.constant 0 : index
    %c0_0 = arith.constant 0 : index
    %0 = vector.load %arg4[%c0, %c0_0] : memref<8x4xf32, #tpu.memory_space<vmem>>, vector<8x4xf32>
    %c0_1 = arith.constant 0 : index
    %c0_2 = arith.constant 0 : index
    %1 = vector.load %arg5[%c0_1, %c0_2] : memref<8x1xf32, #tpu.memory_space<vmem>>, vector<8x1xf32>
    %c0_3 = arith.constant 0 : index
    %c0_4 = arith.constant 0 : index
    %c0_5 = arith.constant 0 : index
    %2 = vector.load %arg3[%c0_3, %c0_4, %c0_5] : memref<2x4x256xf32, #tpu.memory_space<vmem>>, vector<1x4x256xf32>
    %3 = vector.shape_cast %2 : vector<1x4x256xf32> to vector<4x256xf32>
    %cst = arith.constant dense<0.000000e+00> : vector<8x256xf32>
    %4 = tpu.matmul %0, %3, %cst {dimension_numbers = #tpu.dot_dimension_numbers<[1], [0], [0], [1], [0, 0, 1, 1], [], []>} : vector<8x4xf32>, vector<4x256xf32>, vector<8x256xf32> -> vector<8x256xf32>
    %5 = vector.broadcast %1 : vector<8x1xf32> to vector<8x256xf32>
    %6 = arith.addf %4, %5 : vector<8x256xf32>
    %c0_6 = arith.constant 0 : index
    %c0_7 = arith.constant 0 : index
    %c0_8 = arith.constant 0 : index
    %7 = vector.load %arg6[%c0_6, %c0_7, %c0_8] : memref<2x8x256xf32, #tpu.memory_space<vmem>>, vector<1x8x256xf32>
    %8 = vector.shape_cast %7 : vector<1x8x256xf32> to vector<8x256xf32>
    %9 = vector.shape_cast %6 : vector<8x256xf32> to vector<1x8x256xf32>
    tpu.vector_store %arg6[%c0_6, %c0_7, %c0_8], %9 {strides = array<i32>} : memref<2x8x256xf32, #tpu.memory_space<vmem>>, vector<1x8x256xf32>,
    %c1 = arith.constant 1 : index
    %c0_9 = arith.constant 0 : index
    %c0_10 = arith.constant 0 : index
    %10 = vector.load %arg3[%c1, %c0_9, %c0_10] : memref<2x4x256xf32, #tpu.memory_space<vmem>>, vector<1x4x256xf32>
    %11 = vector.shape_cast %10 : vector<1x4x256xf32> to vector<4x256xf32>
    %cst_11 = arith.constant dense<0.000000e+00> : vector<8x256xf32>
    %12 = tpu.matmul %0, %11, %cst_11 {dimension_numbers = #tpu.dot_dimension_numbers<[1], [0], [0], [1], [0, 0, 1, 1], [], []>} : vector<8x4xf32>, vector<4x256xf32>, vector<8x256xf32> -> vector<8x256xf32>
    %13 = vector.broadcast %1 : vector<8x1xf32> to vector<8x256xf32>
    %14 = arith.addf %12, %13 : vector<8x256xf32>
    %c1_12 = arith.constant 1 : index
    %c0_13 = arith.constant 0 : index
    %c0_14 = arith.constant 0 : index
    %15 = vector.load %arg6[%c1_12, %c0_13, %c0_14] : memref<2x8x256xf32, #tpu.memory_space<vmem>>, vector<1x8x256xf32>
    %16 = vector.shape_cast %15 : vector<1x8x256xf32> to vector<8x256xf32>
    %17 = vector.shape_cast %14 : vector<8x256xf32> to vector<1x8x256xf32>
    tpu.vector_store %arg6[%c1_12, %c0_13, %c0_14], %17 {strides = array<i32>} : memref<2x8x256xf32, #tpu.memory_space<vmem>>, vector<1x8x256xf32>,
    return
  }
  func.func @transform_0(%arg0: i32, %arg1: i32, %arg2: i32) -> (i32, i32, i32) {
    %c0_i32 = arith.constant 0 : i32
    return %arg0, %arg2, %arg1 : i32, i32, i32
  }
  func.func @transform_1(%arg0: i32, %arg1: i32, %arg2: i32) -> (i32, i32) {
    %c0_i32 = arith.constant 0 : i32
    %c0_i32_0 = arith.constant 0 : i32
    %c0_i32_1 = arith.constant 0 : i32
    return %c0_i32, %c0_i32_0 : i32, i32
  }
  func.func @transform_2(%arg0: i32, %arg1: i32, %arg2: i32) -> (i32, i32) {
    %c0_i32 = arith.constant 0 : i32
    %c0_i32_0 = arith.constant 0 : i32
    %c0_i32_1 = arith.constant 0 : i32
    return %c0_i32, %c0_i32_0 : i32, i32
  }
  func.func @transform_3(%arg0: i32, %arg1: i32, %arg2: i32) -> (i32, i32, i32) {
    %c0_i32 = arith.constant 0 : i32
    %c0_i32_0 = arith.constant 0 : i32
    return %arg0, %c0_i32, %arg1 : i32, i32, i32
  }
}

</mosaic_0001>

<llo_original>
// kernel: tpu_custom_call.1
$region0: #{tpu_custom_call.1}
  #allocation0 [shape = 'u32[]', space=smem, size = 0x4, offset = 0x4, fixed_abs, tag = 'smem constant byte address 0x4 - core index']
  #allocation1 [shape = 'u32[144,128]{1,0:T(1,128)}', space=vmem, size = 0x12000, scoped, tag = 'internal scratch']
  %s0 = inlined_call_operand.vmem [shape: f32[2,4,256], index: 0, kind: input, shape index: {}]
  %s1 = inlined_call_operand.vmem [shape: f32[8,4], index: 1, kind: input, shape index: {}]
  %s2 = inlined_call_operand.vmem [shape: f32[8,1], index: 2, kind: input, shape index: {}]
  %s3 = inlined_call_operand.hbm [shape: f32[2,8,256], index: 3, kind: output, shape index: {}]
  %s4 = sld [smem:[#allocation0]]
  $region22: #{tpu_custom_call.1} parent=0
    _
  %s6 = ssub.s32 1, %s4
  %s7 = scalar_select 0, %s6, %s4
  $region1: #{tpu_custom_call.1} parent=0
    #allocation2 [shape = 'u8[16384]{0}', space=vmem, size = 0x4000, scoped, tag = 'output window, operand 0, single buffered']
    #allocation3 [shape = 's32[1]{0}', space=sflag, size = 0x4, scoped, tag = 'scoped memory for tpu_custom_call.1']
    %8 = vsyncpa [#allocation3], 0
    // Predicated region
    $region2: #{tpu_custom_call.1} parent=1 // pred_check
      _
    $region3: #{tpu_custom_call.1} parent=1 // pred_check_branch
      %10 = sbr.rel (0) target = $region5
    $region4: #{tpu_custom_call.1} parent=1 // pred_region
      _
    $region5: #{tpu_custom_call.1} parent=1 // pred_fallthru
      _
    // Predicated region
    $region6: #{tpu_custom_call.1} parent=1 // pred_check
      _
    $region7: #{tpu_custom_call.1} parent=1 // pred_check_branch
      %12 = sbr.rel (0) target = $region9
    $region8: #{tpu_custom_call.1} parent=1 // pred_region
      _
    $region9: #{tpu_custom_call.1} parent=1 // pred_fallthru
      _
    // Predicated region
    $region10: #{tpu_custom_call.1} parent=1 // pred_check
      _
    $region11: #{tpu_custom_call.1} parent=1 // pred_check_branch
      %14 = sbr.rel (0) target = $region13
    $region12: #{tpu_custom_call.1} parent=1 // pred_region
      _
    $region13: #{tpu_custom_call.1} parent=1 // pred_fallthru
      _
    %v15 = vld [vmem:[%s1] sm:$0xff]
    %v16 = vld [vmem:[%s2] sm:$0xff]
    %v17 = vld [vmem:[%s0] sm:$0xff]
    %19 = vset.pattern.permute.xlu0 0
    %20 = vperm.xlu0 %19, %v16
    %v21 = vpop.permute.xlu0 %20
    %v24 = vcombine.high %v17, %v17
    %vm25 = vcmask 31744
    %v27 = vsel %vm25, %v15, 0
    %vm29 = vcmask 1043456
    %v30 = vsel %vm29, %v17, 0
    %v32 = vsel %vm29, %v24, 0
    %34 = vmatprep.subr.mxu0 %v32
    %35 = vmatpush1.msra.mxu0 %v30
    %36 = vmatprep.subr.mxu0 0.0
    %37 = vmatpush1.msra.mxu0 0.0
    %38 = vmatprep.subr.mxu0 0.0
    %39 = vmatpush1.msra.mxu0 0.0
    %40 = vmatprep.subr.mxu0 0.0
    %41 = vmatpush1.msra.mxu0 0.0
    %42 = vmatprep.subr.mxu0 0.0
    %43 = vmatpush1.msra.mxu0 0.0
    %44 = vmatprep.subr.mxu0 0.0
    %45 = vmatpush1.msra.mxu0 0.0
    %46 = vmatprep.subr.mxu0 0.0
    %47 = vmatpush1.msra.mxu0 0.0
    %48 = vmatprep.subr.mxu0 0.0
    %49 = vmatpush1.msra.mxu0 0.0
    %50 = vmatprep.subr.mxu0 0.0
    %51 = vmatpush1.msra.mxu0 0.0
    %52 = vmatprep.subr.mxu0 0.0
    %53 = vmatpush1.msra.mxu0 0.0
    %54 = vmatprep.subr.mxu0 0.0
    %55 = vmatpush1.msra.mxu0 0.0
    %56 = vmatprep.subr.mxu0 0.0
    %57 = vmatpush1.msra.mxu0 0.0
    %58 = vmatprep.subr.mxu0 0.0
    %59 = vmatpush1.msra.mxu0 0.0
    %60 = vmatprep.subr.mxu0 0.0
    %61 = vmatpush1.msra.mxu0 0.0
    %62 = vmatprep.subr.mxu0 0.0
    %63 = vmatpush1.msra.mxu0 0.0
    %64 = vmatprep.subr.mxu0 0.0
    %65 = vmatpush1.msra.mxu0 0.0
    %66 = vmatprep.subr.mxu0 0.0
    %67 = vmatpush1.msra.mxu0 0.0
    %68 = vmatprep.subr.mxu0 0.0
    %69 = vmatpush1.msra.mxu0 0.0
    %70 = vmatprep.subr.mxu0 0.0
    %71 = vmatpush1.msra.mxu0 0.0
    %72 = vmatprep.subr.mxu0 0.0
    %73 = vmatpush1.msra.mxu0 0.0
    %74 = vmatprep.subr.mxu0 0.0
    %75 = vmatpush1.msra.mxu0 0.0
    %76 = vmatprep.subr.mxu0 0.0
    %77 = vmatpush1.msra.mxu0 0.0
    %78 = vmatprep.subr.mxu0 0.0
    %79 = vmatpush1.msra.mxu0 0.0
    %80 = vmatprep.subr.mxu0 0.0
    %81 = vmatpush1.msra.mxu0 0.0
    %82 = vmatprep.subr.mxu0 0.0
    %83 = vmatpush1.msra.mxu0 0.0
    %84 = vmatprep.subr.mxu0 0.0
    %85 = vmatpush1.msra.mxu0 0.0
    %86 = vmatprep.subr.mxu0 0.0
    %87 = vmatpush1.msra.mxu0 0.0
    %88 = vmatprep.subr.mxu0 0.0
    %89 = vmatpush1.msra.mxu0 0.0
    %90 = vmatprep.subr.mxu0 0.0
    %91 = vmatpush1.msra.mxu0 0.0
    %92 = vmatprep.subr.mxu0 0.0
    %93 = vmatpush1.msra.mxu0 0.0
    %94 = vmatprep.subr.mxu0 0.0
    %95 = vmatpush1.msra.mxu0 0.0
    %96 = vmatprep.subr.mxu0 0.0
    %97 = vmatpush1.msra.mxu0 0.0
    %98 = vmatprep.mubr.f32.mxu0 0.0
    %99 = vmatmul.mubr.f32.gmra.mrb[0].mxu0 %v27
    %v100 = vpop.f32.mrb[0].mxu0
    %v101 = vadd.f32 %v21, %v100
    %v102 = vpop.f32.mrb[0].mxu0
    %v103 = vadd.f32 %v21, %v102
    %104 = vdwg.mxu0
    %105 = vst [vmem:[#allocation2] sm:$0xff] %v101
    %106 = vst [vmem:[#allocation2 + $0x8] sm:$0xff] %v103
    %s107 = scalar_lea.vmem %s0, 8
    %v108 = vld [vmem:[%s107] sm:$0xff]
    %v110 = vcombine.high %v108, %v108
    %v111 = vsel %vm29, %v108, 0
    %v113 = vsel %vm29, %v110, 0
    %115 = vmatprep.subr.mxu0 %v113
    %116 = vmatpush1.msra.mxu0 %v111
    %117 = vmatprep.subr.mxu0 0.0
    %118 = vmatpush1.msra.mxu0 0.0
    %119 = vmatprep.subr.mxu0 0.0
    %120 = vmatpush1.msra.mxu0 0.0
    %121 = vmatprep.subr.mxu0 0.0
    %122 = vmatpush1.msra.mxu0 0.0
    %123 = vmatprep.subr.mxu0 0.0
    %124 = vmatpush1.msra.mxu0 0.0
    %125 = vmatprep.subr.mxu0 0.0
    %126 = vmatpush1.msra.mxu0 0.0
    %127 = vmatprep.subr.mxu0 0.0
    %128 = vmatpush1.msra.mxu0 0.0
    %129 = vmatprep.subr.mxu0 0.0
    %130 = vmatpush1.msra.mxu0 0.0
    %131 = vmatprep.subr.mxu0 0.0
    %132 = vmatpush1.msra.mxu0 0.0
    %133 = vmatprep.subr.mxu0 0.0
    %134 = vmatpush1.msra.mxu0 0.0
    %135 = vmatprep.subr.mxu0 0.0
    %136 = vmatpush1.msra.mxu0 0.0
    %137 = vmatprep.subr.mxu0 0.0
    %138 = vmatpush1.msra.mxu0 0.0
    %139 = vmatprep.subr.mxu0 0.0
    %140 = vmatpush1.msra.mxu0 0.0
    %141 = vmatprep.subr.mxu0 0.0
    %142 = vmatpush1.msra.mxu0 0.0
    %143 = vmatprep.subr.mxu0 0.0
    %144 = vmatpush1.msra.mxu0 0.0
    %145 = vmatprep.subr.mxu0 0.0
    %146 = vmatpush1.msra.mxu0 0.0
    %147 = vmatprep.subr.mxu0 0.0
    %148 = vmatpush1.msra.mxu0 0.0
    %149 = vmatprep.subr.mxu0 0.0
    %150 = vmatpush1.msra.mxu0 0.0
    %151 = vmatprep.subr.mxu0 0.0
    %152 = vmatpush1.msra.mxu0 0.0
    %153 = vmatprep.subr.mxu0 0.0
    %154 = vmatpush1.msra.mxu0 0.0
    %155 = vmatprep.subr.mxu0 0.0
    %156 = vmatpush1.msra.mxu0 0.0
    %157 = vmatprep.subr.mxu0 0.0
    %158 = vmatpush1.msra.mxu0 0.0
    %159 = vmatprep.subr.mxu0 0.0
    %160 = vmatpush1.msra.mxu0 0.0
    %161 = vmatprep.subr.mxu0 0.0
    %162 = vmatpush1.msra.mxu0 0.0
    %163 = vmatprep.subr.mxu0 0.0
    %164 = vmatpush1.msra.mxu0 0.0
    %165 = vmatprep.subr.mxu0 0.0
    %166 = vmatpush1.msra.mxu0 0.0
    %167 = vmatprep.subr.mxu0 0.0
    %168 = vmatpush1.msra.mxu0 0.0
    %169 = vmatprep.subr.mxu0 0.0
    %170 = vmatpush1.msra.mxu0 0.0
    %171 = vmatprep.subr.mxu0 0.0
    %172 = vmatpush1.msra.mxu0 0.0
    %173 = vmatprep.subr.mxu0 0.0
    %174 = vmatpush1.msra.mxu0 0.0
    %175 = vmatprep.subr.mxu0 0.0
    %176 = vmatpush1.msra.mxu0 0.0
    %177 = vmatprep.subr.mxu0 0.0
    %178 = vmatpush1.msra.mxu0 0.0
    %179 = vmatprep.mubr.f32.mxu0 0.0
    %180 = vmatmul.mubr.f32.gmra.mrb[0].mxu0 %v27
    %v181 = vpop.f32.mrb[0].mxu0
    %v182 = vadd.f32 %v21, %v181
    %v183 = vpop.f32.mrb[0].mxu0
    %v184 = vadd.f32 %v21, %v183
    %185 = vdwg.mxu0
    %s186 = scalar_lea.vmem [#allocation2], 16
    %187 = vst [vmem:[%s186] sm:$0xff] %v182
    %188 = vst [vmem:[%s186 + $0x8] sm:$0xff] %v184
    // Predicated region
    $region14: #{tpu_custom_call.1} parent=1 // pred_check
      _
    $region15: #{tpu_custom_call.1} parent=1 // pred_check_branch
      %190 = sbr.rel (0) target = $region17
    $region16: #{tpu_custom_call.1} parent=1 // pred_region
      %s192 = ssub.s32 512, 512
      %193 = vsyncadd [#allocation3], %s192
      %s194 = sshll.u32 [#allocation2], 4
      %s195 = int_to_ptr.vmem [resolvable:$true] %s194
      %200 = dma.vmem_to_hbm [thread:$0]  %s195, 512, %s3, [#allocation3], 256, 256, 16
    $region17: #{tpu_custom_call.1} parent=1 // pred_fallthru
      _
    // Predicated region
    $region18: #{tpu_custom_call.1} parent=1 // pred_check
      _
    $region19: #{tpu_custom_call.1} parent=1 // pred_check_branch
      %202 = sbr.rel (0) target = $region21
    $region20: #{tpu_custom_call.1} parent=1 // pred_region
      %203 = dma.done [#allocation3], 512
    $region21: #{tpu_custom_call.1} parent=1 // pred_fallthru
      _
    %204 = vsyncpa [#allocation3], 1

</llo_original>
